<compile_context>
chip_gen: v7x
topology: tpu7x:2x2x1
jax: 0.10.0
libtpu: 0.0.40
codegen_flags: <defaults>
</compile_context>

<pallas_src>
import functools

import jax
import jax.numpy as jnp
from jax.experimental import pallas as pl
from jax.experimental.pallas import tpu as pltpu


def _round_up(x: int, m: int) -> int:
    return ((x + m - 1) // m) * m


def _linear_kernel(x_ref, w_ref, b_ref, o_ref, *, compute_dtype):
    # x_ref: (TILE_N, feat_dim)     native input dtype (cast in-kernel, free on VPU)
    # w_ref: (feat_dim, WAY_PAD)    compute dtype, [K, N] layout, resident across grid
    # b_ref: (1, WAY_PAD)           float32, resident across grid
    # o_ref: (TILE_N, WAY_PAD)      output dtype
    x = x_ref[...].astype(compute_dtype)
    acc = jnp.dot(x, w_ref[...], preferred_element_type=jnp.float32)
    o_ref[...] = (acc + b_ref[...]).astype(o_ref.dtype)


@functools.partial(jax.jit,
                   static_argnames=("tile_n", "compute_dtype", "out_dtype"))
def anil_layer_forward(x, weight, bias, *, tile_n=1024,
                       compute_dtype=jnp.bfloat16, out_dtype=None):
    """ANILLayer.forward: Linear(feat_dim -> way_num).

    x:      [N, feat_dim]
    weight: [way_num, feat_dim]   (PyTorch convention, NOT transposed)
    bias:   [way_num]
    returns [N, way_num]

    Note: compute_dtype=bfloat16 (default) feeds the MXU in bf16 and changes
    numerics vs. the f32 PyTorch Linear; accumulation and the bias add stay in
    float32.  Pass compute_dtype=jnp.float32 for bit-faithful parity.
    """
    n, feat_dim = x.shape
    way_num = weight.shape[0]
    out_dtype = x.dtype if out_dtype is None else out_dtype

    # --- Lane-dense output: pad way_num up to a multiple of 128. ------------
    way_pad = _round_up(max(way_num, 1), 128)
    # Pre-transpose the (tiny) weight into native MXU [K, N] layout.
    w_p = jnp.zeros((feat_dim, way_pad), compute_dtype)
    w_p = w_p.at[:, :way_num].set(weight.T.astype(compute_dtype))
    b_p = jnp.zeros((1, way_pad), jnp.float32)
    b_p = b_p.at[0, :way_num].set(bias.astype(jnp.float32))

    # --- Row tile: 16-sublane aligned (bf16-native packing). ----------------
    sub = 16
    if n > tile_n:
        tn = _round_up(tile_n, sub)
    elif n > 2048:
        # Single huge block would leave one v7x TensorCore idle: split in two.
        tn = min(_round_up(pl.cdiv(n, 2), sub), _round_up(tile_n, sub))
    else:
        tn = _round_up(max(n, 1), sub)

    # No row padding of x: Pallas masks the partial last block, and the
    # garbage rows of that block only correspond to out-of-bounds output rows,
    # which are never written back.
    grid = (pl.cdiv(n, tn),)

    x_bytes = n * feat_dim * jnp.dtype(x.dtype).itemsize
    bytes_accessed = (
        x_bytes
        + feat_dim * way_pad * jnp.dtype(compute_dtype).itemsize   # W
        + way_pad * 4                                              # bias
        + n * way_pad * jnp.dtype(out_dtype).itemsize              # out
    )
    cost = pl.CostEstimate(
        flops=2 * n * feat_dim * way_pad,
        transcendentals=0,
        bytes_accessed=bytes_accessed,
    )

    kernel = functools.partial(_linear_kernel, compute_dtype=compute_dtype)

    out = pl.pallas_call(
        kernel,
        out_shape=jax.ShapeDtypeStruct((n, way_pad), out_dtype),
        grid=grid,
        in_specs=[
            pl.BlockSpec((tn, feat_dim), lambda i: (i, 0)),        # x tiles
            pl.BlockSpec((feat_dim, way_pad), lambda i: (0, 0)),   # W resident
            pl.BlockSpec((1, way_pad), lambda i: (0, 0)),          # bias resident
        ],
        out_specs=pl.BlockSpec((tn, way_pad), lambda i: (i, 0)),
        compiler_params=pltpu.CompilerParams(
            dimension_semantics=("parallel",),
        ),
        cost_estimate=cost,
    )(x, w_p, b_p)

    # Strip lane padding only (no row padding was introduced).
    # TODO(synk): for best end-to-end perf, let the consumer (softmax / CE)
    # take the padded [n, way_pad] logits directly and mask columns >= way_num
    # so this slice copy fuses away.
    return out[:, :way_num]


if __name__ == "__main__":
    # Small shapes implied by the module: feat_dim features -> way_num classes.
    batch = 8
    feat_dim = 32
    way_num = 5

    key = jax.random.PRNGKey(0)
    kx, kw, kb, kx2 = jax.random.split(key, 4)

    # Deterministic parameter init mimicking nn.Linear defaults
    # (uniform(-1/sqrt(fan_in), 1/sqrt(fan_in))).
    bound = 1.0 / jnp.sqrt(jnp.float32(feat_dim))
    weight = jax.random.uniform(kw, (way_num, feat_dim), jnp.float32,
                                minval=-bound, maxval=bound)
    bias = jax.random.uniform(kb, (way_num,), jnp.float32,
                              minval=-bound, maxval=bound)

    # --- small (single grid step, partial block: 8 rows in a 16-row tile) ---
    x = jax.random.normal(kx, (batch, feat_dim), jnp.float32)
    y = jax.block_until_ready(anil_layer_forward(x, weight, bias))
    y_ref = x @ weight.T + bias
    assert y.shape == (batch, way_num)
    assert jnp.allclose(y, y_ref, atol=2e-2, rtol=2e-2), (
        float(jnp.max(jnp.abs(y - y_ref))))

    # --- f32 compute path: exact parity with the PyTorch Linear -------------
    y32 = jax.block_until_ready(
        anil_layer_forward(x, weight, bias, compute_dtype=jnp.float32))
    assert jnp.allclose(y32, y_ref, atol=1e-5, rtol=1e-5), (
        float(jnp.max(jnp.abs(y32 - y_ref))))

    # --- larger batch: multi-step parallel grid + masked partial last block -
    batch2 = 300
    x2 = jax.random.normal(kx2, (batch2, feat_dim), jnp.float32)
    y2 = jax.block_until_ready(
        anil_layer_forward(x2, weight, bias, tile_n=128))
    y2_ref = x2 @ weight.T + bias
    assert y2.shape == (batch2, way_num)
    assert jnp.allclose(y2, y2_ref, atol=2e-2, rtol=2e-2), (
        float(jnp.max(jnp.abs(y2 - y2_ref))))

    print("KERNEL_OK")
</pallas_src>

<mosaic_0001>
module attributes {stable_mosaic.version = 11 : i64} {
  func.func @_linear_kernel(%arg0: i32, %arg1: memref<16x32xf32, #tpu.memory_space<vmem>>, %arg2: memref<32x128xbf16, #tpu.memory_space<vmem>>, %arg3: memref<1x128xf32, #tpu.memory_space<vmem>>, %arg4: memref<16x128xf32, #tpu.memory_space<vmem>>) attributes {dimension_semantics = [#tpu.dimension_semantics<parallel>], iteration_bounds = array<i64: 1>, scalar_prefetch = 0 : i64, scratch_operands = 0 : i64, tpu.core_type = #tpu.core_type<tc>, window_params = [{transform_indices = @transform_0, window_bounds = array<i64: 16, 32>}, {pipeline_mode = #tpu.pipeline_mode<synchronous>, transform_indices = @transform_1, window_bounds = array<i64: 32, 128>}, {pipeline_mode = #tpu.pipeline_mode<synchronous>, transform_indices = @transform_2, window_bounds = array<i64: 1, 128>}, {transform_indices = @transform_3, window_bounds = array<i64: 16, 128>}]} {
    %c0 = arith.constant 0 : index
    %c0_0 = arith.constant 0 : index
    %0 = vector.load %arg1[%c0, %c0_0] : memref<16x32xf32, #tpu.memory_space<vmem>>, vector<16x32xf32>
    %1 = arith.truncf %0 : vector<16x32xf32> to vector<16x32xbf16>
    %c0_1 = arith.constant 0 : index
    %c0_2 = arith.constant 0 : index
    %2 = vector.load %arg2[%c0_1, %c0_2] : memref<32x128xbf16, #tpu.memory_space<vmem>>, vector<32x128xbf16>
    %cst = arith.constant dense<0.000000e+00> : vector<16x128xf32>
    %3 = tpu.matmul %1, %2, %cst {dimension_numbers = #tpu.dot_dimension_numbers<[1], [0], [0], [1], [0, 0, 1, 1], [], []>} : vector<16x32xbf16>, vector<32x128xbf16>, vector<16x128xf32> -> vector<16x128xf32>
    %c0_3 = arith.constant 0 : index
    %c0_4 = arith.constant 0 : index
    %4 = vector.load %arg3[%c0_3, %c0_4] : memref<1x128xf32, #tpu.memory_space<vmem>>, vector<1x128xf32>
    %5 = vector.broadcast %4 : vector<1x128xf32> to vector<16x128xf32>
    %6 = arith.addf %3, %5 : vector<16x128xf32>
    %c0_5 = arith.constant 0 : index
    %c0_6 = arith.constant 0 : index
    %7 = vector.load %arg4[%c0_5, %c0_6] : memref<16x128xf32, #tpu.memory_space<vmem>>, vector<16x128xf32>
    tpu.vector_store %arg4[%c0_5, %c0_6], %6 {strides = array<i32>} : memref<16x128xf32, #tpu.memory_space<vmem>>, vector<16x128xf32>,
    return
  }
  func.func @transform_0(%arg0: i32) -> (i32, i32) {
    %c0_i32 = arith.constant 0 : i32
    %c0_i32_0 = arith.constant 0 : i32
    return %arg0, %c0_i32 : i32, i32
  }
  func.func @transform_1(%arg0: i32) -> (i32, i32) {
    %c0_i32 = arith.constant 0 : i32
    %c0_i32_0 = arith.constant 0 : i32
    %c0_i32_1 = arith.constant 0 : i32
    return %c0_i32, %c0_i32_0 : i32, i32
  }
  func.func @transform_2(%arg0: i32) -> (i32, i32) {
    %c0_i32 = arith.constant 0 : i32
    %c0_i32_0 = arith.constant 0 : i32
    %c0_i32_1 = arith.constant 0 : i32
    return %c0_i32, %c0_i32_0 : i32, i32
  }
  func.func @transform_3(%arg0: i32) -> (i32, i32) {
    %c0_i32 = arith.constant 0 : i32
    %c0_i32_0 = arith.constant 0 : i32
    return %arg0, %c0_i32 : i32, i32
  }
}

</mosaic_0001>

<llo_original>
// kernel: anil_layer_forward.1
$region0: #{anil_layer_forward.1}
  #allocation0 [shape = 'u32[]', space=smem, size = 0x4, offset = 0x4, fixed_abs, tag = 'smem constant byte address 0x4 - core index']
  #allocation1 [shape = 'u32[144,128]{1,0:T(1,128)}', space=vmem, size = 0x12000, scoped, tag = 'internal scratch']
  %s0 = inlined_call_operand.vmem [shape: f32[8,32], index: 0, kind: input, shape index: {}]
  %s1 = inlined_call_operand.vmem [shape: bf16[32,128], index: 1, kind: input, shape index: {}]
  %s2 = inlined_call_operand.vmem [shape: f32[1,128], index: 2, kind: input, shape index: {}]
  %s3 = inlined_call_operand.hbm [shape: f32[8,128], index: 3, kind: output, shape index: {}]
  %s4 = sld [smem:[#allocation0]]
  $region22: #{anil_layer_forward.1} parent=0
    _
  %s6 = ssub.s32 1, %s4
  %s7 = scalar_select 0, %s6, %s4
  $region1: #{anil_layer_forward.1} parent=0
    #allocation2 [shape = 'u8[8192]{0}', space=vmem, size = 0x2000, scoped, tag = 'output window, operand 0, single buffered']
    #allocation3 [shape = 's32[1]{0}', space=sflag, size = 0x4, scoped, tag = 'scoped memory for anil_layer_forward.1']
    %8 = vsyncpa [#allocation3], 0
    // Predicated region
    $region2: #{anil_layer_forward.1} parent=1 // pred_check
      _
    $region3: #{anil_layer_forward.1} parent=1 // pred_check_branch
      %10 = sbr.rel (0) target = $region5
    $region4: #{anil_layer_forward.1} parent=1 // pred_region
      _
    $region5: #{anil_layer_forward.1} parent=1 // pred_fallthru
      _
    // Predicated region
    $region6: #{anil_layer_forward.1} parent=1 // pred_check
      _
    $region7: #{anil_layer_forward.1} parent=1 // pred_check_branch
      %12 = sbr.rel (0) target = $region9
    $region8: #{anil_layer_forward.1} parent=1 // pred_region
      _
    $region9: #{anil_layer_forward.1} parent=1 // pred_fallthru
      _
    // Predicated region
    $region10: #{anil_layer_forward.1} parent=1 // pred_check
      _
    $region11: #{anil_layer_forward.1} parent=1 // pred_check_branch
      %14 = sbr.rel (0) target = $region13
    $region12: #{anil_layer_forward.1} parent=1 // pred_region
      _
    $region13: #{anil_layer_forward.1} parent=1 // pred_fallthru
      _
    %v16 = vld [vmem:[%s0] sm:$0xff]
    %v17 = vld [vmem:[%s0 + $0x8] sm:$0xff]
    %v18 = vpack.c.bf16 %v17, %v16
    %v19 = vld [vmem:[%s1] sm:$0xf]
    %v20 = vld [vmem:[%s1 + $0x4] sm:$0xf]
    %v21 = vld [vmem:[%s1 + $0x8] sm:$0xf]
    %v22 = vld [vmem:[%s1 + $0xc] sm:$0xf]
    %v23 = vld [vmem:[%s2] sm:$0x1]
    %v25 = vlaneseq
    %v26 = vshrl.u32 %v25, 7
    %v27 = vsub.s32 0, %v26
    %v28 = vrot.slane %v23, %v27
    %v34 = vunpack.c.l.b16 %v19
    %v35 = vunpack.c.l.b16 %v20
    %v36 = vunpack.c.l.b16 %v21
    %v37 = vunpack.c.l.b16 %v22
    %v38 = vpack.c.b16 %v35, %v34
    %v39 = vpack.c.b16 %v37, %v36
    %vm42 = vcmask 261120
    %v44 = vsel %vm42, %v18, 0
    %46 = vmatprep.subr.bf16.mxu0 0
    %47 = vmatpush1.bf16.msra.mxu0 %v38
    %48 = vmatprep.subr.bf16.mxu0 0
    %49 = vmatpush1.bf16.msra.mxu0 %v39
    %50 = vmatprep.subr.bf16.mxu0 0
    %51 = vmatpush1.bf16.msra.mxu0 0
    %52 = vmatprep.subr.bf16.mxu0 0
    %53 = vmatpush1.bf16.msra.mxu0 0
    %54 = vmatprep.subr.bf16.mxu0 0
    %55 = vmatpush1.bf16.msra.mxu0 0
    %56 = vmatprep.subr.bf16.mxu0 0
    %57 = vmatpush1.bf16.msra.mxu0 0
    %58 = vmatprep.subr.bf16.mxu0 0
    %59 = vmatpush1.bf16.msra.mxu0 0
    %60 = vmatprep.subr.bf16.mxu0 0
    %61 = vmatpush1.bf16.msra.mxu0 0
    %62 = vmatprep.subr.bf16.mxu0 0
    %63 = vmatpush1.bf16.msra.mxu0 0
    %64 = vmatprep.subr.bf16.mxu0 0
    %65 = vmatpush1.bf16.msra.mxu0 0
    %66 = vmatprep.subr.bf16.mxu0 0
    %67 = vmatpush1.bf16.msra.mxu0 0
    %68 = vmatprep.subr.bf16.mxu0 0
    %69 = vmatpush1.bf16.msra.mxu0 0
    %70 = vmatprep.subr.bf16.mxu0 0
    %71 = vmatpush1.bf16.msra.mxu0 0
    %72 = vmatprep.subr.bf16.mxu0 0
    %73 = vmatpush1.bf16.msra.mxu0 0
    %74 = vmatprep.subr.bf16.mxu0 0
    %75 = vmatpush1.bf16.msra.mxu0 0
    %76 = vmatprep.subr.bf16.mxu0 0
    %77 = vmatpush1.bf16.msra.mxu0 0
    %78 = vmatprep.mubr.bf16.mxu0 0
    %79 = vmatmul.mubr.bf16.gmra.mrb[0].mxu0 %v44
    %v80 = vpop.f32.mrb[0].mxu0
    %v81 = vadd.f32 %v28, %v80
    %v82 = vpop.f32.mrb[0].mxu0
    %v83 = vpop.f32.mrb[0].mxu0
    %v84 = vadd.f32 %v28, %v83
    %v85 = vpop.f32.mrb[0].mxu0
    %86 = vdwg.mxu0
    %87 = vst [vmem:[#allocation2] sm:$0xff] %v81
    %88 = vst [vmem:[#allocation2 + $0x8] sm:$0xff] %v84
    // Predicated region
    $region14: #{anil_layer_forward.1} parent=1 // pred_check
      _
    $region15: #{anil_layer_forward.1} parent=1 // pred_check_branch
      %90 = sbr.rel (0) target = $region17
    $region16: #{anil_layer_forward.1} parent=1 // pred_region
      %s92 = ssub.s32 256, 128
      %93 = vsyncadd [#allocation3], %s92
      %s94 = sshll.u32 [#allocation2], 4
      %s95 = int_to_ptr.vmem [resolvable:$true] %s94
      %100 = dma.vmem_to_hbm [thread:$0]  %s95, 128, %s3, [#allocation3], 128, 128, 8
    $region17: #{anil_layer_forward.1} parent=1 // pred_fallthru
      _
    // Predicated region
    $region18: #{anil_layer_forward.1} parent=1 // pred_check
      _
    $region19: #{anil_layer_forward.1} parent=1 // pred_check_branch
      %102 = sbr.rel (0) target = $region21
    $region20: #{anil_layer_forward.1} parent=1 // pred_region
      %103 = dma.done [#allocation3], 256
    $region21: #{anil_layer_forward.1} parent=1 // pred_fallthru
      _
    %104 = vsyncpa [#allocation3], 1

</llo_original>
